<compile_context>
chip_gen: v7x
topology: tpu7x:2x2x1
jax: 0.10.0
libtpu: 0.0.40
codegen_flags: <defaults>
</compile_context>

<pallas_src>
import numpy as np
import jax
import jax.numpy as jnp
from jax import lax
from jax.experimental import pallas as pl
from jax.experimental.pallas import tpu as pltpu


M = 2  # WeightNet hyper-parameters (fixed in the PyTorch module)
G = 2


def _round_up(v, m):
    return (v + m - 1) // m * m


def _choose_row_tile(hout, pitch, target_lanes):
    """Largest divisor `th` of `hout` with (th*pitch) % 128 == 0 and
    th*pitch <= target_lanes.  Falls back to the full extent (always a legal
    block) if no 128-aligned divisor exists."""
    cands = [th for th in range(1, hout + 1)
             if hout % th == 0 and (th * pitch) % 128 == 0]
    if not cands:
        return hout
    small = [th for th in cands if th * pitch <= target_lanes]
    return max(small) if small else min(cands)


# ---------------------------------------------------------------------------
# Kernel 1: WeightNet gate  s = sigmoid(x_gap @ W1^T + b1)  -> [B, G*oup]
# ---------------------------------------------------------------------------
def _gate_kernel(xg_ref, w1t_ref, b1_ref, s_ref):
    z = jnp.dot(xg_ref[...], w1t_ref[...], preferred_element_type=jnp.float32)
    s_ref[...] = jax.nn.sigmoid(z + b1_ref[...])


def _weightnet_gate(x_gap_flat, w1t, b1row):
    B = x_gap_flat.shape[0]
    n_out = w1t.shape[1]
    return pl.pallas_call(
        _gate_kernel,
        out_shape=jax.ShapeDtypeStruct((B, n_out), jnp.float32),
        grid=(1,),
        in_specs=[
            pl.BlockSpec(x_gap_flat.shape, lambda i: (0, 0)),
            pl.BlockSpec(w1t.shape, lambda i: (0, 0)),
            pl.BlockSpec(b1row.shape, lambda i: (0, 0)),
        ],
        out_specs=pl.BlockSpec((B, n_out), lambda i: (0, 0)),
    )(x_gap_flat, w1t, b1row)


# ---------------------------------------------------------------------------
# Kernel 2: fused dynamic convolution (stride-1 core).
# ---------------------------------------------------------------------------
def _make_dynconv_kernel(ksize, th, pitch, cpg, compute_dtype):
    kk = ksize * ksize
    lanes = th * pitch  # flat lane width of one output row-tile

    def kernel(s_ref, w2_ref, x_ref, o_ref):
        # s_ref : [oup, G]            sigmoid gates (batch dim squeezed)
        # w2_ref: [k*k, oup, inp]     static fc2 weights, tap-major
        # x_ref : [inp, Hp*P + tail]  full padded sample, rows flattened at pitch P
        # o_ref : [oup, TH*P]         one tile of output rows (pitch P)
        j = pl.program_id(1)
        base = pl.multiple_of(j * lanes, 128)          # flat offset of first output row
        acc = jnp.zeros(o_ref.shape, jnp.float32)
        for t in range(kk):                            # static unroll over taps
            ky, kx = t // ksize, t % ksize
            off = base + ky * pitch + kx
            for gc in range(G):                        # static unroll over fc2 groups
                lo = gc * cpg
                # dynamic weight chunk: gate column broadcast over channels (VPU)
                w_t = (s_ref[:, gc:gc + 1] *
                       w2_ref[t, :, lo:lo + cpg]).astype(compute_dtype)
                # contiguous flat slice of the resident image (no reshape needed)
                x_t = x_ref[lo:lo + cpg, pl.ds(off, lanes)].astype(compute_dtype)
                acc = acc + jnp.dot(w_t, x_t, preferred_element_type=jnp.float32)
        o_ref[...] = acc.astype(o_ref.dtype)

    return kernel


# ---------------------------------------------------------------------------
# Full forward pass.
# ---------------------------------------------------------------------------
def weight_conv_forward(x, x_gap, w1, b1, w2, *, inp, oup, ksize, stride,
                        compute_dtype=jnp.float32, target_lanes=2048):
    assert inp % G == 0, "kernel assumes inp divisible by G (always true for odd ksize)"
    # TODO(synk): support inp % G != 0 (only possible for even ksize) via per-element group ids.
    pad = ksize // 2
    B, _, H, W = x.shape
    Hp, Wp = H + 2 * pad, W + 2 * pad
    Hout1 = Hp - ksize + 1          # stride-1 output extent computed by the kernel
    Wout1 = Wp - ksize + 1
    cpg = inp // G
    kk = ksize * ksize

    # ---- gate: s[b, o*G + gc] ----------------------------------------------
    x_gap_flat = x_gap.reshape(B, -1).astype(jnp.float32)
    w1t = w1.reshape(M * oup, -1).T.astype(jnp.float32)          # [inp_gap, M*oup]
    b1row = b1.reshape(1, M * oup).astype(jnp.float32)
    s = _weightnet_gate(x_gap_flat, w1t, b1row)                  # [B, G*oup]
    s3 = s.reshape(B, oup, G)                                    # s3[b, o, gc]

    # ---- static fc2 weights, tap-major layout [k*k, oup, inp] ---------------
    w2_tap = (w2.reshape(oup, inp, ksize, ksize)
                .transpose(2, 3, 0, 1)
                .reshape(kk, oup, inp)
                .astype(compute_dtype))

    # ---- padded input with rows flattened at a lane-friendly pitch ----------
    pitch = _round_up(Wp, 32)
    x_pad = jnp.pad(x, ((0, 0), (0, 0), (pad, pad), (pad, pitch - W - pad)))
    flat_len = _round_up(Hp * pitch + ksize, 128)        # slack so tap slices stay in-bounds
    x_flat = jnp.pad(x_pad.reshape(B, inp, Hp * pitch),
                     ((0, 0), (0, 0), (0, flat_len - Hp * pitch))
                     ).astype(compute_dtype)             # [B, inp, flat_len]

    # ---- spatial row tiling (lane-dense, 128-aligned output blocks) ---------
    th = _choose_row_tile(Hout1, pitch, target_lanes)
    n_tiles = Hout1 // th
    lanes = th * pitch

    kernel = _make_dynconv_kernel(ksize, th, pitch, cpg, compute_dtype)
    out_flat = pl.pallas_call(
        kernel,
        out_shape=jax.ShapeDtypeStruct((B, oup, Hout1 * pitch), jnp.float32),
        grid=(B, n_tiles),
        in_specs=[
            pl.BlockSpec((pl.Squeezed(), oup, G), lambda b, j: (b, 0, 0)),
            pl.BlockSpec((kk, oup, inp), lambda b, j: (0, 0, 0)),
            pl.BlockSpec((pl.Squeezed(), inp, flat_len), lambda b, j: (b, 0, 0)),
        ],
        out_specs=pl.BlockSpec((pl.Squeezed(), oup, lanes), lambda b, j: (b, 0, j)),
        compiler_params=pltpu.CompilerParams(
            dimension_semantics=("parallel", "parallel"),
            # sized for v7x's 64 MiB VMEM/TC; v5e/v6e (128 MiB) have headroom to spare
            vmem_limit_bytes=48 * 1024 * 1024),
    )(s3.astype(jnp.float32), w2_tap, x_flat)

    # ---- strip pitch padding; subsample for stride > 1 ----------------------
    out = out_flat.reshape(B, oup, Hout1, pitch)[:, :, :, :Wout1]
    if stride > 1:
        # TODO(synk): dedicated strided tap addressing would avoid computing the
        # stride-1 result and subsampling it.
        Hout = (H + 2 * pad - ksize) // stride + 1
        Wout = (W + 2 * pad - ksize) // stride + 1
        out = out[:, :, ::stride, ::stride][:, :, :Hout, :Wout]
    return out


# ---------------------------------------------------------------------------
# Pure-JAX reference (mirrors the PyTorch forward, grouped-conv path).
# ---------------------------------------------------------------------------
def reference_forward(x, x_gap, w1, b1, w2, *, inp, oup, ksize, stride):
    pad = ksize // 2
    B, _, H, W = x.shape
    L = inp * ksize * ksize // G
    s = jax.nn.sigmoid(x_gap.reshape(B, -1) @ w1.reshape(M * oup, -1).T
                       + b1.reshape(1, -1))
    group_of = jnp.arange(oup * inp * ksize * ksize) // L
    dyn = s[:, group_of] * w2.reshape(1, -1)
    weights = dyn.reshape(B * oup, inp, ksize, ksize)
    xr = x.reshape(1, B * inp, H, W)
    out = lax.conv_general_dilated(
        xr, weights, window_strides=(stride, stride),
        padding=[(pad, pad), (pad, pad)],
        dimension_numbers=("NCHW", "OIHW", "NCHW"),
        feature_group_count=B,
        precision=lax.Precision.HIGHEST)
    return out.reshape(B, oup, out.shape[2], out.shape[3])


if __name__ == "__main__":
    inp, oup, ksize, stride = 4, 8, 3, 1
    B, H, W = 2, 16, 16
    inp_gap = max(16, inp // 16)

    key = jax.random.PRNGKey(0)
    k_x, k_g, k_w1, k_b1, k_w2 = jax.random.split(key, 5)
    x = jax.random.normal(k_x, (B, inp, H, W), jnp.float32)
    x_gap = jax.random.normal(k_g, (B, inp_gap, 1, 1), jnp.float32)
    w1 = jax.random.normal(k_w1, (M * oup, inp_gap, 1, 1), jnp.float32) / np.sqrt(inp_gap)
    b1 = jax.random.normal(k_b1, (M * oup,), jnp.float32) * 0.1
    w2 = jax.random.normal(k_w2, (oup * inp * ksize * ksize, 1, 1, 1), jnp.float32) * 0.1

    ref = reference_forward(x, x_gap, w1, b1, w2,
                            inp=inp, oup=oup, ksize=ksize, stride=stride)

    # f32 path (small target_lanes so the demo exercises >1 spatial tile per sample).
    out = weight_conv_forward(x, x_gap, w1, b1, w2, inp=inp, oup=oup,
                              ksize=ksize, stride=stride,
                              compute_dtype=jnp.float32, target_lanes=256)
    out = jax.block_until_ready(out)
    np.testing.assert_allclose(np.asarray(out), np.asarray(ref), rtol=1e-2, atol=1e-2)

    # bf16 MXU path (recommended on v6e/v7x), looser tolerance.
    out_bf16 = weight_conv_forward(x, x_gap, w1, b1, w2, inp=inp, oup=oup,
                                   ksize=ksize, stride=stride,
                                   compute_dtype=jnp.bfloat16, target_lanes=256)
    out_bf16 = jax.block_until_ready(out_bf16)
    np.testing.assert_allclose(np.asarray(out_bf16), np.asarray(ref), rtol=5e-2, atol=5e-2)

    print("KERNEL_OK")
</pallas_src>

<mosaic_0001>
module attributes {stable_mosaic.version = 11 : i64} {
  func.func @_gate_kernel(%arg0: i32, %arg1: memref<2x16xf32, #tpu.memory_space<vmem>>, %arg2: memref<16x16xf32, #tpu.memory_space<vmem>>, %arg3: memref<1x16xf32, #tpu.memory_space<vmem>>, %arg4: memref<2x16xf32, #tpu.memory_space<vmem>>) attributes {dimension_semantics = [#tpu.dimension_semantics<arbitrary>], iteration_bounds = array<i64: 1>, scalar_prefetch = 0 : i64, scratch_operands = 0 : i64, tpu.core_type = #tpu.core_type<tc>, window_params = [{pipeline_mode = #tpu.pipeline_mode<synchronous>, transform_indices = @transform_0, window_bounds = array<i64: 2, 16>}, {pipeline_mode = #tpu.pipeline_mode<synchronous>, transform_indices = @transform_1, window_bounds = array<i64: 16, 16>}, {pipeline_mode = #tpu.pipeline_mode<synchronous>, transform_indices = @transform_2, window_bounds = array<i64: 1, 16>}, {pipeline_mode = #tpu.pipeline_mode<synchronous>, transform_indices = @transform_3, window_bounds = array<i64: 2, 16>}]} {
    %c0 = arith.constant 0 : index
    %c0_0 = arith.constant 0 : index
    %0 = vector.load %arg1[%c0, %c0_0] : memref<2x16xf32, #tpu.memory_space<vmem>>, vector<2x16xf32>
    %c0_1 = arith.constant 0 : index
    %c0_2 = arith.constant 0 : index
    %1 = vector.load %arg2[%c0_1, %c0_2] : memref<16x16xf32, #tpu.memory_space<vmem>>, vector<16x16xf32>
    %cst = arith.constant dense<0.000000e+00> : vector<2x16xf32>
    %2 = tpu.matmul %0, %1, %cst {dimension_numbers = #tpu.dot_dimension_numbers<[1], [0], [0], [1], [0, 0, 1, 1], [], []>} : vector<2x16xf32>, vector<16x16xf32>, vector<2x16xf32> -> vector<2x16xf32>
    %c0_3 = arith.constant 0 : index
    %c0_4 = arith.constant 0 : index
    %3 = vector.load %arg3[%c0_3, %c0_4] : memref<1x16xf32, #tpu.memory_space<vmem>>, vector<1x16xf32>
    %4 = vector.broadcast %3 : vector<1x16xf32> to vector<2x16xf32>
    %5 = arith.addf %2, %4 : vector<2x16xf32>
    %6 = arith.negf %5 : vector<2x16xf32>
    %7 = math.exp %6 : vector<2x16xf32>
    %cst_5 = arith.constant 1.000000e+00 : f32
    %8 = vector.broadcast %cst_5 : f32 to vector<2x16xf32>
    %9 = arith.addf %8, %7 : vector<2x16xf32>
    %10 = arith.divf %8, %9 : vector<2x16xf32>
    %c0_6 = arith.constant 0 : index
    %c0_7 = arith.constant 0 : index
    %11 = vector.load %arg4[%c0_6, %c0_7] : memref<2x16xf32, #tpu.memory_space<vmem>>, vector<2x16xf32>
    tpu.vector_store %arg4[%c0_6, %c0_7], %10 {strides = array<i32>} : memref<2x16xf32, #tpu.memory_space<vmem>>, vector<2x16xf32>,
    return
  }
  func.func @transform_0(%arg0: i32) -> (i32, i32) {
    %c0_i32 = arith.constant 0 : i32
    %c0_i32_0 = arith.constant 0 : i32
    %c0_i32_1 = arith.constant 0 : i32
    return %c0_i32, %c0_i32_0 : i32, i32
  }
  func.func @transform_1(%arg0: i32) -> (i32, i32) {
    %c0_i32 = arith.constant 0 : i32
    %c0_i32_0 = arith.constant 0 : i32
    %c0_i32_1 = arith.constant 0 : i32
    return %c0_i32, %c0_i32_0 : i32, i32
  }
  func.func @transform_2(%arg0: i32) -> (i32, i32) {
    %c0_i32 = arith.constant 0 : i32
    %c0_i32_0 = arith.constant 0 : i32
    %c0_i32_1 = arith.constant 0 : i32
    return %c0_i32, %c0_i32_0 : i32, i32
  }
  func.func @transform_3(%arg0: i32) -> (i32, i32) {
    %c0_i32 = arith.constant 0 : i32
    %c0_i32_0 = arith.constant 0 : i32
    %c0_i32_1 = arith.constant 0 : i32
    return %c0_i32, %c0_i32_0 : i32, i32
  }
}

</mosaic_0001>

<llo_original>
// kernel: tpu_custom_call.1
$region0: #{tpu_custom_call.1}
  #allocation0 [shape = 'u32[]', space=smem, size = 0x4, offset = 0x4, fixed_abs, tag = 'smem constant byte address 0x4 - core index']
  #allocation1 [shape = 'u32[144,128]{1,0:T(1,128)}', space=vmem, size = 0x12000, scoped, tag = 'internal scratch']
  %s0 = inlined_call_operand.hbm [shape: f32[2,16], index: 0, kind: input, shape index: {}]
  %s1 = inlined_call_operand.hbm [shape: f32[16,16], index: 1, kind: input, shape index: {}]
  %s2 = inlined_call_operand.vmem [shape: f32[1,16], index: 2, kind: input, shape index: {}]
  %s3 = inlined_call_operand.hbm [shape: f32[2,16], index: 3, kind: output, shape index: {}]
  %s4 = sld [smem:[#allocation0]]
  $region30: #{tpu_custom_call.1} parent=0
    _
  %s6 = ssub.s32 1, %s4
  %s7 = scalar_select 0, %s6, %s4
  $region1: #{tpu_custom_call.1} parent=0
    #allocation2 [shape = 'u8[1024]{0}', space=vmem, size = 0x400, scoped, tag = 'input window, operand 0, single buffered']
    #allocation3 [shape = 's32[1]{0}', space=sflag, size = 0x4, scoped, tag = 'scoped memory for tpu_custom_call.1']
    #allocation4 [shape = 's32[1]{0}', space=sflag, size = 0x4, scoped, tag = 'scoped memory for tpu_custom_call.1']
    #allocation5 [shape = 'u8[8192]{0}', space=vmem, size = 0x2000, scoped, tag = 'input window, operand 1, single buffered']
    #allocation6 [shape = 's32[1]{0}', space=sflag, size = 0x4, scoped, tag = 'scoped memory for tpu_custom_call.1']
    #allocation7 [shape = 'u8[1024]{0}', space=vmem, size = 0x400, scoped, tag = 'output window, operand 0, single buffered']
    %8 = vsyncpa [#allocation3], 0
    %9 = vsyncpa [#allocation6], 0
    %10 = vsyncpa [#allocation4], 0
    // Predicated region
    $region2: #{tpu_custom_call.1} parent=1 // pred_check
      _
    $region3: #{tpu_custom_call.1} parent=1 // pred_check_branch
      %12 = sbr.rel (0) target = $region5
    $region4: #{tpu_custom_call.1} parent=1 // pred_region
      %s14 = ssub.s32 32, 32
      %15 = vsyncadd [#allocation3], %s14
      %s17 = sshll.u32 [#allocation2], 4
      %s18 = int_to_ptr.vmem [resolvable:$true] %s17
      %20 = dma.hbm_to_vmem [thread:$0]  %s0, 32, %s18, [#allocation3]
    $region5: #{tpu_custom_call.1} parent=1 // pred_fallthru
      _
    // Predicated region
    $region6: #{tpu_custom_call.1} parent=1 // pred_check
      _
    $region7: #{tpu_custom_call.1} parent=1 // pred_check_branch
      %22 = sbr.rel (0) target = $region9
    $region8: #{tpu_custom_call.1} parent=1 // pred_region
      %s24 = ssub.s32 256, 256
      %25 = vsyncadd [#allocation6], %s24
      %s26 = sshll.u32 [#allocation5], 4
      %s27 = int_to_ptr.vmem [resolvable:$true] %s26
      %32 = dma.hbm_to_vmem [thread:$0]  %s1, 256, %s27, [#allocation6], 128, 128, 8
    $region9: #{tpu_custom_call.1} parent=1 // pred_fallthru
      _
    // Predicated region
    $region10: #{tpu_custom_call.1} parent=1 // pred_check
      _
    $region11: #{tpu_custom_call.1} parent=1 // pred_check_branch
      %34 = sbr.rel (0) target = $region13
    $region12: #{tpu_custom_call.1} parent=1 // pred_region
      _
    $region13: #{tpu_custom_call.1} parent=1 // pred_fallthru
      _
    // Predicated region
    $region14: #{tpu_custom_call.1} parent=1 // pred_check
      _
    $region15: #{tpu_custom_call.1} parent=1 // pred_check_branch
      %36 = sbr.rel (0) target = $region17
    $region16: #{tpu_custom_call.1} parent=1 // pred_region
      %37 = dma.done [#allocation3], 32
    $region17: #{tpu_custom_call.1} parent=1 // pred_fallthru
      _
    // Predicated region
    $region18: #{tpu_custom_call.1} parent=1 // pred_check
      _
    $region19: #{tpu_custom_call.1} parent=1 // pred_check_branch
      %39 = sbr.rel (0) target = $region21
    $region20: #{tpu_custom_call.1} parent=1 // pred_region
      %40 = dma.done [#allocation6], 256
    $region21: #{tpu_custom_call.1} parent=1 // pred_fallthru
      _
    %v41 = vld [vmem:[#allocation2] sm:$0x3]
    %v42 = vld [vmem:[#allocation5] sm:$0xff]
    %v43 = vld [vmem:[#allocation5 + $0x8] sm:$0xff]
    %v44 = vld [vmem:[%s2] sm:$0x1]
    %v46 = vlaneseq
    %v47 = vshrl.u32 %v46, 7
    %v48 = vsub.s32 0, %v47
    %v49 = vrot.slane %v44, %v48
    %vm51 = vcmask 130048
    %v53 = vsel %vm51, %v41, 0
    %55 = vmatprep.subr.mxu0 0.0
    %56 = vmatpush1.msra.mxu0 %v42
    %57 = vmatprep.subr.mxu0 0.0
    %58 = vmatpush1.msra.mxu0 %v43
    %59 = vmatprep.subr.mxu0 0.0
    %60 = vmatpush1.msra.mxu0 0.0
    %61 = vmatprep.subr.mxu0 0.0
    %62 = vmatpush1.msra.mxu0 0.0
    %63 = vmatprep.subr.mxu0 0.0
    %64 = vmatpush1.msra.mxu0 0.0
    %65 = vmatprep.subr.mxu0 0.0
    %66 = vmatpush1.msra.mxu0 0.0
    %67 = vmatprep.subr.mxu0 0.0
    %68 = vmatpush1.msra.mxu0 0.0
    %69 = vmatprep.subr.mxu0 0.0
    %70 = vmatpush1.msra.mxu0 0.0
    %71 = vmatprep.subr.mxu0 0.0
    %72 = vmatpush1.msra.mxu0 0.0
    %73 = vmatprep.subr.mxu0 0.0
    %74 = vmatpush1.msra.mxu0 0.0
    %75 = vmatprep.subr.mxu0 0.0
    %76 = vmatpush1.msra.mxu0 0.0
    %77 = vmatprep.subr.mxu0 0.0
    %78 = vmatpush1.msra.mxu0 0.0
    %79 = vmatprep.subr.mxu0 0.0
    %80 = vmatpush1.msra.mxu0 0.0
    %81 = vmatprep.subr.mxu0 0.0
    %82 = vmatpush1.msra.mxu0 0.0
    %83 = vmatprep.subr.mxu0 0.0
    %84 = vmatpush1.msra.mxu0 0.0
    %85 = vmatprep.subr.mxu0 0.0
    %86 = vmatpush1.msra.mxu0 0.0
    %87 = vmatprep.subr.mxu0 0.0
    %88 = vmatpush1.msra.mxu0 0.0
    %89 = vmatprep.subr.mxu0 0.0
    %90 = vmatpush1.msra.mxu0 0.0
    %91 = vmatprep.subr.mxu0 0.0
    %92 = vmatpush1.msra.mxu0 0.0
    %93 = vmatprep.subr.mxu0 0.0
    %94 = vmatpush1.msra.mxu0 0.0
    %95 = vmatprep.subr.mxu0 0.0
    %96 = vmatpush1.msra.mxu0 0.0
    %97 = vmatprep.subr.mxu0 0.0
    %98 = vmatpush1.msra.mxu0 0.0
    %99 = vmatprep.subr.mxu0 0.0
    %100 = vmatpush1.msra.mxu0 0.0
    %101 = vmatprep.subr.mxu0 0.0
    %102 = vmatpush1.msra.mxu0 0.0
    %103 = vmatprep.subr.mxu0 0.0
    %104 = vmatpush1.msra.mxu0 0.0
    %105 = vmatprep.subr.mxu0 0.0
    %106 = vmatpush1.msra.mxu0 0.0
    %107 = vmatprep.subr.mxu0 0.0
    %108 = vmatpush1.msra.mxu0 0.0
    %109 = vmatprep.subr.mxu0 0.0
    %110 = vmatpush1.msra.mxu0 0.0
    %111 = vmatprep.subr.mxu0 0.0
    %112 = vmatpush1.msra.mxu0 0.0
    %113 = vmatprep.subr.mxu0 0.0
    %114 = vmatpush1.msra.mxu0 0.0
    %115 = vmatprep.subr.mxu0 0.0
    %116 = vmatpush1.msra.mxu0 0.0
    %117 = vmatprep.subr.mxu0 0.0
    %118 = vmatpush1.msra.mxu0 0.0
    %119 = vmatprep.mubr.f32.mxu0 0.0
    %120 = vmatmul.mubr.f32.gmra.mrb[0].mxu0 %v53
    %v121 = vpop.f32.mrb[0].mxu0
    %v122 = vadd.f32 %v49, %v121
    %v123 = vpop.f32.mrb[0].mxu0
    %124 = vdwg.mxu0
    %v125 = vxor.u32 %v122, 2147483648
    %v126 = vmul.f32 %v125, 1.442695
    %v127 = vpow.pop %v126
    %v128 = vadd.f32 %v127, 1.0
    %v129 = vrcp.pop %v128
    %v130 = vmul.f32 1.0, %v129
    %vm131 = vcmask 123904
    %132 = vst.msk [vmem:[#allocation7] sm:$0x3] %vm131, %v130
    // Predicated region
    $region22: #{tpu_custom_call.1} parent=1 // pred_check
      _
    $region23: #{tpu_custom_call.1} parent=1 // pred_check_branch
      %134 = sbr.rel (0) target = $region25
    $region24: #{tpu_custom_call.1} parent=1 // pred_region
      %s136 = ssub.s32 32, 32
      %137 = vsyncadd [#allocation4], %s136
      %s139 = sshll.u32 [#allocation7], 4
      %s140 = int_to_ptr.vmem [resolvable:$true] %s139
      %142 = dma.vmem_to_hbm [thread:$0]  %s140, 32, %s3, [#allocation4]
    $region25: #{tpu_custom_call.1} parent=1 // pred_fallthru
      _
    // Predicated region
    $region26: #{tpu_custom_call.1} parent=1 // pred_check
      _
    $region27: #{tpu_custom_call.1} parent=1 // pred_check_branch
      %144 = sbr.rel (0) target = $region29
    $region28: #{tpu_custom_call.1} parent=1 // pred_region
      %145 = dma.done [#allocation4], 32
    $region29: #{tpu_custom_call.1} parent=1 // pred_fallthru
      _
    %146 = vsyncpa [#allocation3], 1
    %147 = vsyncpa [#allocation6], 1
    %148 = vsyncpa [#allocation4], 1

</llo_original>
